<compile_context>
chip_gen: v7x
topology: tpu7x:2x2x1
jax: 0.10.0
libtpu: 0.0.40
codegen_flags: <defaults>
</compile_context>

<pallas_src>
import functools
import math

import jax
import jax.numpy as jnp
from jax.experimental import pallas as pl
from jax.experimental.pallas import tpu as pltpu


# ---------------------------------------------------------------------------
# Kernel: fused sum-of-squares reduction + rescale, one batch element per step
# ---------------------------------------------------------------------------
def _instance_l2_norm_kernel(x_ref, o_ref, *, norm_const, eps):
    x = x_ref[0]                                        # (R, 128), f32
    ssq = jnp.sum(x * x)                                # scalar reduce (XLU)
    factor = norm_const * jax.lax.rsqrt(ssq + eps)      # EUP rsqrt
    o_ref[0] = (x * factor).astype(o_ref.dtype)


def instance_l2_norm(x, *, size_average=True, eps=1e-5, scale=1.0):
    """x: (B, C, H, W) -> InstanceL2Norm(x), same shape/dtype."""
    B, C, H, W = x.shape
    N = C * H * W

    LANES = 128
    TILE = 8 * LANES                                    # full (8,128) vreg
    Npad = ((N + TILE - 1) // TILE) * TILE
    R = Npad // LANES                                   # multiple of 8

    xf = x.reshape(B, N).astype(jnp.float32)
    if Npad != N:
        xf = jnp.pad(xf, ((0, 0), (0, Npad - N)))       # zeros: ssq unchanged
    x3 = xf.reshape(B, R, LANES)

    # Fold both size_average branches into one multiplicative constant.
    norm_const = scale * math.sqrt(N) if size_average else scale

    kernel = functools.partial(
        _instance_l2_norm_kernel, norm_const=float(norm_const), eps=float(eps))

    out = pl.pallas_call(
        kernel,
        out_shape=jax.ShapeDtypeStruct((B, R, LANES), jnp.float32),
        grid=(B,),
        in_specs=[pl.BlockSpec((1, R, LANES), lambda b: (b, 0, 0))],
        out_specs=pl.BlockSpec((1, R, LANES), lambda b: (b, 0, 0)),
        compiler_params=pltpu.CompilerParams(
            dimension_semantics=("parallel",)),
    )(x3)

    out = out.reshape(B, Npad)[:, :N].reshape(B, C, H, W)
    return out.astype(x.dtype)


# ---------------------------------------------------------------------------
# Pure-JAX reference (mirror of the PyTorch forward) for verification
# ---------------------------------------------------------------------------
def _instance_l2_norm_ref(x, *, size_average=True, eps=1e-5, scale=1.0):
    B, C, H, W = x.shape
    ssq = jnp.sum((x * x).reshape(B, 1, 1, -1), axis=3, keepdims=True)
    if size_average:
        return x * (scale * jnp.sqrt(C * H * W / (ssq + eps)))
    return x * (scale / jnp.sqrt(ssq + eps))


# ---------------------------------------------------------------------------
if __name__ == "__main__":
    B, C, H, W = 2, 4, 16, 16
    key = jax.random.PRNGKey(0)
    x = jax.random.normal(key, (B, C, H, W), dtype=jnp.float32)

    # Default module config: size_average=True, eps=1e-5, scale=1.0
    y = instance_l2_norm(x, size_average=True, eps=1e-5, scale=1.0)
    jax.block_until_ready(y)

    y_ref = _instance_l2_norm_ref(x, size_average=True, eps=1e-5, scale=1.0)
    assert y.shape == (B, C, H, W)
    assert jnp.allclose(y, y_ref, rtol=1e-5, atol=1e-5)

    # Also exercise the size_average=False branch.
    y2 = instance_l2_norm(x, size_average=False, eps=1e-5, scale=2.0)
    jax.block_until_ready(y2)
    y2_ref = _instance_l2_norm_ref(x, size_average=False, eps=1e-5, scale=2.0)
    assert jnp.allclose(y2, y2_ref, rtol=1e-5, atol=1e-5)

    print("KERNEL_OK")
</pallas_src>

<mosaic_0001>
module attributes {stable_mosaic.version = 11 : i64} {
  func.func @_instance_l2_norm_kernel(%arg0: i32, %arg1: memref<1x8x128xf32, #tpu.memory_space<vmem>>, %arg2: memref<1x8x128xf32, #tpu.memory_space<vmem>>) attributes {dimension_semantics = [#tpu.dimension_semantics<parallel>], iteration_bounds = array<i64: 2>, scalar_prefetch = 0 : i64, scratch_operands = 0 : i64, tpu.core_type = #tpu.core_type<tc>, window_params = [{transform_indices = @transform_0, window_bounds = array<i64: 1, 8, 128>}, {transform_indices = @transform_1, window_bounds = array<i64: 1, 8, 128>}]} {
    %c0 = arith.constant 0 : index
    %c0_0 = arith.constant 0 : index
    %c0_1 = arith.constant 0 : index
    %0 = vector.load %arg1[%c0, %c0_0, %c0_1] : memref<1x8x128xf32, #tpu.memory_space<vmem>>, vector<1x8x128xf32>
    %1 = vector.shape_cast %0 : vector<1x8x128xf32> to vector<8x128xf32>
    %2 = arith.mulf %1, %1 : vector<8x128xf32>
    %3 = vector.shape_cast %2 : vector<8x128xf32> to vector<1x8x128xf32>
    %cst = arith.constant dense<0.000000e+00> : vector<1xf32>
    %4 = vector.multi_reduction <add>, %3, %cst [1, 2] : vector<1x8x128xf32> to vector<1xf32>
    %5 = vector.shape_cast %4 : vector<1xf32> to vector<1x1x1xf32>
    %6 = vector.extract %5[0, 0, 0] : f32 from vector<1x1x1xf32>
    %cst_2 = arith.constant 9.99999974E-6 : f32
    %7 = arith.addf %6, %cst_2 : f32
    %8 = math.rsqrt %7 : f32
    %cst_3 = arith.constant 3.200000e+01 : f32
    %9 = arith.mulf %cst_3, %8 : f32
    %10 = vector.broadcast %9 : f32 to vector<8x128xf32>
    %11 = arith.mulf %1, %10 : vector<8x128xf32>
    %c0_4 = arith.constant 0 : index
    %c0_5 = arith.constant 0 : index
    %c0_6 = arith.constant 0 : index
    %12 = vector.load %arg2[%c0_4, %c0_5, %c0_6] : memref<1x8x128xf32, #tpu.memory_space<vmem>>, vector<1x8x128xf32>
    %13 = vector.shape_cast %12 : vector<1x8x128xf32> to vector<8x128xf32>
    %14 = vector.shape_cast %11 : vector<8x128xf32> to vector<1x8x128xf32>
    tpu.vector_store %arg2[%c0_4, %c0_5, %c0_6], %14 {strides = array<i32>} : memref<1x8x128xf32, #tpu.memory_space<vmem>>, vector<1x8x128xf32>,
    return
  }
  func.func @transform_0(%arg0: i32) -> (i32, i32, i32) {
    %c0_i32 = arith.constant 0 : i32
    %c0_i32_0 = arith.constant 0 : i32
    %c0_i32_1 = arith.constant 0 : i32
    return %arg0, %c0_i32, %c0_i32_0 : i32, i32, i32
  }
  func.func @transform_1(%arg0: i32) -> (i32, i32, i32) {
    %c0_i32 = arith.constant 0 : i32
    %c0_i32_0 = arith.constant 0 : i32
    %c0_i32_1 = arith.constant 0 : i32
    return %arg0, %c0_i32, %c0_i32_0 : i32, i32, i32
  }
}

</mosaic_0001>

<llo_original>
// kernel: tpu_custom_call.1
$region0: #{tpu_custom_call.1}
  #allocation0 [shape = 'u32[]', space=smem, size = 0x4, offset = 0x4, fixed_abs, tag = 'smem constant byte address 0x4 - core index']
  #allocation1 [shape = 'u32[144,128]{1,0:T(1,128)}', space=vmem, size = 0x12000, scoped, tag = 'internal scratch']
  %s0 = inlined_call_operand.hbm [shape: f32[2,8,128], index: 0, kind: input, shape index: {}]
  %s1 = inlined_call_operand.hbm [shape: f32[2,8,128], index: 1, kind: output, shape index: {}]
  %s2 = sld [smem:[#allocation0]]
  $region41: #{tpu_custom_call.1} parent=0
    _
  %s4 = ssub.s32 1, %s2
  %s5 = scalar_select 0, %s4, %s2
  $region1: #{tpu_custom_call.1} parent=0
    #allocation2 [shape = 'u8[8192]{0}', space=vmem, size = 0x2000, scoped, tag = 'input window, operand 0']
    #allocation3 [shape = 's32[2]{0}', space=sflag, size = 0x8, scoped, tag = 'scoped memory for tpu_custom_call.1']
    #allocation4 [shape = 's32[2]{0}', space=sflag, size = 0x8, scoped, tag = 'scoped memory for tpu_custom_call.1']
    #allocation5 [shape = 'u8[8192]{0}', space=vmem, size = 0x2000, scoped, tag = 'output window, operand 0']
    %6 = vsyncpa [#allocation3], 0
    %s7 = scalar_lea.sflag [#allocation3], 1
    %8 = vsyncpa %s7, 0
    %9 = vsyncpa [#allocation4], 0
    %s10 = scalar_lea.sflag [#allocation4], 1
    %11 = vsyncpa %s10, 0
    loop: start=0, step=1, limit=4
    $region2: #{tpu_custom_call.1} parent=1 // loop_pre_header
      _
    $region3: #{tpu_custom_call.1} parent=1 // loop_header
      %s13 = sphi 0, %s17
      %p14 = scmp.ge.s32.totalorder %s13, 4
      %s23 = sphi 0, %s25
      %s26 = sphi 0, %s23
      %s27 = sphi 0, %s26
      %s43 = sphi 0, %s27
      %s49 = sphi 0, %s51
      %s52 = sphi 0, %s49
      %s53 = sphi 0, %s52
      %s69 = sphi 0, %s53
    $region4: #{tpu_custom_call.1} parent=1 // loop_header_branch
      %16 = sbr.rel (%p14) target = $region8
    $region5: #{tpu_custom_call.1} parent=1 // loop_body
      %s18 = ssub.s32 %s13, 1
      %s19 = ssub.s32 %s13, 2
      %s20 = sadd.s32 %s13, 1
      %s21 = ssub.s32 %s13, %s20
      %p22 = scmp.eq.s32.totalorder %s21, 0
      %s24 = sadd.s32 %s23, 1
      %s25 = scalar_select %p22, %s23, %s24
      %p28 = pneg %p22
      %p29 = scmp.eq.s32.totalorder %s13, 1
      %p30 = por %p28, %p29
      %p31 = scmp.ne.s32.totalorder %s23, %s26
      %p32 = scmp.eq.s32.totalorder %s13, 0
      %p33 = por %p31, %p32
      %p34 = scmp.ne.s32.totalorder %s23, %s26
      %p35 = scmp.eq.s32.totalorder %s18, 1
      %p36 = por %p34, %p35
      %p37 = scmp.ne.s32.totalorder %s26, %s27
      %p38 = scmp.eq.s32.totalorder %s18, 0
      %p39 = por %p37, %p38
      %p40 = scmp.ne.s32.totalorder %s26, %s27
      %p41 = scmp.eq.s32.totalorder %s19, 1
      %p42 = por %p40, %p41
      %p44 = scmp.ne.s32.totalorder %s27, %s43
      %p45 = scmp.eq.s32.totalorder %s19, 0
      %p46 = por %p44, %p45
      %s47 = ssub.s32 %s13, %s20
      %p48 = scmp.eq.s32.totalorder %s47, 0
      %s50 = sadd.s32 %s49, 1
      %s51 = scalar_select %p48, %s49, %s50
      %p54 = pneg %p48
      %p55 = scmp.eq.s32.totalorder %s13, 1
      %p56 = por %p54, %p55
      %p57 = scmp.ne.s32.totalorder %s49, %s52
      %p58 = scmp.eq.s32.totalorder %s13, 0
      %p59 = por %p57, %p58
      %p60 = scmp.ne.s32.totalorder %s49, %s52
      %p61 = scmp.eq.s32.totalorder %s18, 1
      %p62 = por %p60, %p61
      %p63 = scmp.ne.s32.totalorder %s52, %s53
      %p64 = scmp.eq.s32.totalorder %s18, 0
      %p65 = por %p63, %p64
      %p66 = scmp.ne.s32.totalorder %s52, %s53
      %p67 = scmp.eq.s32.totalorder %s19, 1
      %p68 = por %p66, %p67
      %p70 = scmp.ne.s32.totalorder %s53, %s69
      %p71 = scmp.eq.s32.totalorder %s19, 0
      %p72 = por %p70, %p71
      %p73 = scmp.le.s32.totalorder 1, %s13
      %p74 = scmp.lt.s32.totalorder %s13, 3
      %p75 = pnand %p73, %p74
      %p76 = pneg %p75
      // Predicated region
      $region9: #{tpu_custom_call.1} parent=5 // pred_check
        _
      $region10: #{tpu_custom_call.1} parent=5 // pred_check_branch
        %78 = sbr.rel (%p75) target = $region12
      $region11: #{tpu_custom_call.1} parent=5 // pred_region
        %s79 = ssub.s32 %s13, 1
      $region12: #{tpu_custom_call.1} parent=5 // pred_fallthru
        _
      %p80 = scmp.lt.s32.totalorder %s13, 2
      // Predicated region
      $region13: #{tpu_custom_call.1} parent=5 // pred_check
        %p81 = pneg %p80
      $region14: #{tpu_custom_call.1} parent=5 // pred_check_branch
        %83 = sbr.rel (%p81) target = $region16
      $region15: #{tpu_custom_call.1} parent=5 // pred_region
        // Predicated region
        $region17: #{tpu_custom_call.1} parent=15 // pred_check
          %p84 = pneg %p33
        $region18: #{tpu_custom_call.1} parent=15 // pred_check_branch
          %86 = sbr.rel (%p84) target = $region20
        $region19: #{tpu_custom_call.1} parent=15 // pred_region
          %s87 = sand.u32 %s23, 1
          %s88 = scalar_lea.sflag [#allocation3], %s87
          %s89 = sand.u32 %s23, 1
          %s90 = smul.addr %s89, 8
          %s91 = scalar_lea.vmem [#allocation2], %s90
          %s93 = ssub.s32 128, 128
          %94 = vsyncadd %s88, %s93
          %s95 = smul.addr %s13, 128
          %s96 = scalar_lea.hbm %s0, %s95
          %s98 = sshll.u32 %s91, 4
          %s99 = int_to_ptr.vmem [resolvable:$true] %s98
          %101 = dma.hbm_to_vmem [thread:$0]  %s96, 128, %s99, %s88
        $region20: #{tpu_custom_call.1} parent=15 // pred_fallthru
          _
      $region16: #{tpu_custom_call.1} parent=5 // pred_fallthru
        _
      %p102 = scmp.le.s32.totalorder 1, %s13
      %p103 = scmp.lt.s32.totalorder %s13, 3
      %p104 = pnand %p102, %p103
      %p105 = pneg %p104
      // Predicated region
      $region21: #{tpu_custom_call.1} parent=5 // pred_check
        _
      $region22: #{tpu_custom_call.1} parent=5 // pred_check_branch
        %107 = sbr.rel (%p104) target = $region24
      $region23: #{tpu_custom_call.1} parent=5 // pred_region
        %s108 = ssub.s32 %s13, 1
        %s109 = sand.u32 %s26, 1
        %s110 = scalar_lea.sflag [#allocation3], %s109
        %s111 = sand.u32 %s26, 1
        %s112 = smul.addr %s111, 8
        %s113 = scalar_lea.vmem [#allocation2], %s112
        // Predicated region
        $region25: #{tpu_custom_call.1} parent=23 // pred_check
          %p114 = pneg %p39
        $region26: #{tpu_custom_call.1} parent=23 // pred_check_branch
          %116 = sbr.rel (%p114) target = $region28
        $region27: #{tpu_custom_call.1} parent=23 // pred_region
          %117 = dma.done %s110, 128
        $region28: #{tpu_custom_call.1} parent=23 // pred_fallthru
          _
        %s118 = sand.u32 %s26, 1
        %s119 = scalar_lea.sflag [#allocation3], %s118
        %s120 = sand.u32 %s26, 1
        %s121 = smul.addr %s120, 8
        %s122 = scalar_lea.vmem [#allocation2], %s121
        %p123 = pneg %p39
        %p124 = pneg %p36
        %p125 = pneg %p65
        %p126 = pneg %p62
        %s127 = sand.u32 %s52, 1
        %s128 = scalar_lea.sflag [#allocation4], %s127
        %s129 = sand.u32 %s52, 1
        %s130 = smul.addr %s129, 8
        %s131 = scalar_lea.vmem [#allocation5], %s130
        %v132 = vld [vmem:[%s113] sm:$0xff]
        %v133 = vmul.f32 %v132, %v132
        %134 = vadd.xlane.f32.xlu0 %v133
        %v135 = vpop.xlane.xlu0 %134
        %v136 = vrot.slane %v135, 4
        %v137 = vadd.f32 %v135, %v136
        %v138 = vrot.slane %v137, 2
        %v139 = vadd.f32 %v137, %v138
        %v140 = vrot.slane %v139, 1
        %v141 = vadd.f32 %v139, %v140
        %s142 = vtos %v141
        %s143 = sadd.f32 %s142, 1e-05
        %v144 = vstv %s143
        %v145 = vrsqrt.pop %v144
        %s146 = vtos %v145
        %s147 = smul.f32 %s146, 32.0
        %v148 = vstv %s147
        %v149 = vmul.f32 %v132, %v148
        %150 = vst [vmem:[%s131] sm:$0xff] %v149
        %s151 = sand.u32 %s52, 1
        %s152 = scalar_lea.sflag [#allocation4], %s151
        %s153 = sand.u32 %s52, 1
        %s154 = smul.addr %s153, 8
        %s155 = scalar_lea.vmem [#allocation5], %s154
        // Predicated region
        $region29: #{tpu_custom_call.1} parent=23 // pred_check
          %p156 = pneg %p62
        $region30: #{tpu_custom_call.1} parent=23 // pred_check_branch
          %158 = sbr.rel (%p156) target = $region32
        $region31: #{tpu_custom_call.1} parent=23 // pred_region
          %s160 = ssub.s32 128, 128
          %161 = vsyncadd %s152, %s160
          %s162 = smul.addr %s18, 128
          %s163 = scalar_lea.hbm %s1, %s162
          %s165 = sshll.u32 %s155, 4
          %s166 = int_to_ptr.vmem [resolvable:$true] %s165
          %168 = dma.vmem_to_hbm [thread:$0]  %s166, 128, %s163, %s152
        $region32: #{tpu_custom_call.1} parent=23 // pred_fallthru
          _
      $region24: #{tpu_custom_call.1} parent=5 // pred_fallthru
        _
      %p169 = scmp.le.s32.totalorder 2, %s13
      // Predicated region
      $region33: #{tpu_custom_call.1} parent=5 // pred_check
        %p170 = pneg %p169
      $region34: #{tpu_custom_call.1} parent=5 // pred_check_branch
        %172 = sbr.rel (%p170) target = $region36
      $region35: #{tpu_custom_call.1} parent=5 // pred_region
        %s173 = ssub.s32 %s13, 2
        // Predicated region
        $region37: #{tpu_custom_call.1} parent=35 // pred_check
          %p174 = pneg %p68
        $region38: #{tpu_custom_call.1} parent=35 // pred_check_branch
          %176 = sbr.rel (%p174) target = $region40
        $region39: #{tpu_custom_call.1} parent=35 // pred_region
          %s177 = sand.u32 %s53, 1
          %s178 = scalar_lea.sflag [#allocation4], %s177
          %s179 = sand.u32 %s53, 1
          %s180 = smul.addr %s179, 8
          %s181 = scalar_lea.vmem [#allocation5], %s180
          %182 = dma.done %s178, 128
        $region40: #{tpu_custom_call.1} parent=35 // pred_fallthru
          _
      $region36: #{tpu_custom_call.1} parent=5 // pred_fallthru
        _
    $region6: #{tpu_custom_call.1} parent=1 // loop_footer
      %s17 = sadd.s32 1, %s13
    $region7: #{tpu_custom_call.1} parent=1 // loop_footer_branch
      %12 = sbr.rel target = $region3
    $region8: #{tpu_custom_call.1} parent=1 // loop_exit
      _
    %183 = vsyncpa [#allocation3], 1
    %s184 = scalar_lea.sflag [#allocation3], 1
    %185 = vsyncpa %s184, 1
    %186 = vsyncpa [#allocation4], 1
    %s187 = scalar_lea.sflag [#allocation4], 1
    %188 = vsyncpa %s187, 1

</llo_original>
